<compile_context>
chip_gen: v7x
topology: tpu7x:2x2x1
jax: 0.10.0
libtpu: 0.0.40
codegen_flags: <defaults>
</compile_context>

<pallas_src>
import functools

import jax
import jax.numpy as jnp
import numpy as np
from jax import lax
from jax.experimental import pallas as pl
from jax.experimental.pallas import tpu as pltpu


def _round_up(x, m):
    return (x + m - 1) // m * m


def _cdiv(a, b):
    return (a + b - 1) // b


def _vmem_limit_bytes():
    # ~3/4 of physical VMEM: ~96 MiB on v5e/v6e (128 MiB), ~48 MiB on v7x (64 MiB).
    try:
        cap = int(pltpu.get_tpu_info().vmem_capacity_bytes)
    except Exception:
        cap = 64 * 1024 * 1024
    return max(32 * 1024 * 1024, (cap // 4) * 3)


# ---------------------------------------------------------------------------
# Kernel: one pass over dst-sorted edge tiles.
# grid = (n_edge_tiles,)  ["arbitrary"]  -- consecutive tiles of the same dst
# block accumulate into the resident output block (data-dependent out index).
# ---------------------------------------------------------------------------
def v2i_kernel(tile_block_ref, tile_first_ref, p_ref, lse_ref, dloc_ref,
               src_ref, wp_ref, bp_ref, out_ref, *, negative_slope, tile_d):
    t = pl.program_id(0)

    # First edge tile of this destination block: zero the resident output block.
    @pl.when(tile_first_ref[t] == 1)
    def _():
        out_ref[...] = jnp.zeros_like(out_ref)

    # e = leaky_relu(p); edge_softmax applied with the per-edge log-sum-exp
    # (true per-dst-segment max + denominator) computed once in the wrapper.
    p = p_ref[...]                                            # [TE, aux] f32
    e = jnp.where(p >= 0, p, negative_slope * p)
    a = jnp.exp(e - lse_ref[...])                             # [TE, aux] in (0, 1]

    # self.attn_drop: nn.Dropout is identity in eval mode.
    # a = self.W_extract_pos(a)   (out_dim padded to a lane-dense width)
    a = jnp.dot(a, wp_ref[...], preferred_element_type=jnp.float32) + bp_ref[...]

    # u_mul_e: per-edge gathered source features (bf16, gathered in wrapper).
    m = src_ref[...].astype(jnp.float32) * a                  # [TE, OUT_PAD] f32

    # fn.sum('m','ft'): scatter-sum into this dst block via an in-kernel
    # one-hot; bf16 x bf16 -> f32 on the MXU.  Padding edges carry dloc == -1
    # (all-zero one-hot row) and zero source features, so they contribute 0.
    dl = dloc_ref[...]                                        # [TE, 1] int32
    cols = lax.broadcasted_iota(jnp.int32, (dl.shape[0], tile_d), 1)
    onehot = jnp.where(dl == cols, 1.0, 0.0).astype(jnp.bfloat16)
    out_ref[...] += lax.dot_general(
        onehot, m.astype(jnp.bfloat16),
        dimension_numbers=(((0,), (0,)), ((), ())),
        preferred_element_type=jnp.float32)                   # [TD, OUT_PAD]


def v2i_forward(p, srcdata, src_idx, dst_idx, n_src, n_dst, wp, bp,
                negative_slope=0.2, tile_e_max=1024, tile_d_max=512):
    """p: [E, aux_dim] edge feat; srcdata: [N_src, out_dim]; returns [N_dst, 1, out_dim]."""
    e_num, aux_dim = p.shape
    out_dim = wp.shape[0]

    # ---- tile sizes / padding ---------------------------------------------
    tile_e = min(_round_up(tile_e_max, 16), _round_up(max(e_num, 1), 16))
    tile_d = _round_up(min(tile_d_max, _round_up(n_dst, 8)), 8)
    n_dst_pad = _round_up(n_dst, tile_d)
    n_d_tiles = n_dst_pad // tile_d
    out_pad = _round_up(out_dim, 128)            # lane-dense gather/scatter/output

    # Static upper bound on edge tiles after per-dst-block padding
    # (each block gets >= 1 tile; ceil rounding adds <= 1 tile per block).
    t_max = _cdiv(e_num, tile_e) + n_d_tiles
    rows = t_max * tile_e

    src_idx = src_idx.astype(jnp.int32)
    dst_idx = dst_idx.astype(jnp.int32)
    p_f32 = p.astype(jnp.float32)

    # ---- per-dst softmax log-sum-exp (tiny [E, aux] segment ops) -----------
    e_act = jnp.where(p_f32 >= 0, p_f32, negative_slope * p_f32)
    seg_max = jax.ops.segment_max(e_act, dst_idx, num_segments=n_dst)
    stab_e = seg_max[dst_idx]                                        # [E, aux]
    denom = jax.ops.segment_sum(jnp.exp(e_act - stab_e), dst_idx,
                                num_segments=n_dst)
    lse = stab_e + jnp.log(denom[dst_idx])                           # [E, aux], finite

    # ---- per-edge source-feature gather (wrapper-side, bf16, lane-padded) --
    src_bf = jnp.pad(srcdata.astype(jnp.bfloat16),
                     ((0, 0), (0, out_pad - out_dim)))               # [N_src, OUT_PAD]
    src_e = src_bf[src_idx]                                          # [E, OUT_PAD]

    # ---- dst-block-sorted, per-block tile-padded edge layout ---------------
    blk = dst_idx // tile_d                                          # dst block per edge
    order = jnp.argsort(blk)
    blk_s = blk[order]
    counts = jnp.bincount(blk, length=n_d_tiles).astype(jnp.int32)
    tiles_per_blk = jnp.maximum(1, -(-counts // tile_e)).astype(jnp.int32)
    tile_start = jnp.concatenate(
        [jnp.zeros((1,), jnp.int32), jnp.cumsum(tiles_per_blk)[:-1].astype(jnp.int32)])
    edge_start = jnp.concatenate(
        [jnp.zeros((1,), jnp.int32), jnp.cumsum(counts)[:-1].astype(jnp.int32)])
    pos_in_blk = jnp.arange(e_num, dtype=jnp.int32) - edge_start[blk_s]
    dest_row = tile_e * tile_start[blk_s] + pos_in_blk               # unique row per edge

    def _scatter(x_sorted, fill, dtype):
        buf = jnp.full((rows,) + x_sorted.shape[1:], fill, dtype)
        return buf.at[dest_row].set(x_sorted.astype(dtype))

    p_pad = _scatter(p_f32[order], 0, jnp.float32)
    lse_pad = _scatter(lse[order], 0, jnp.float32)
    src_pad = _scatter(src_e[order], 0, jnp.bfloat16)
    dloc = (dst_idx - blk * tile_d)[:, None]                         # local dst id
    dloc_pad = _scatter(dloc[order], -1, jnp.int32)                  # -1 -> zero one-hot row

    # ---- per-tile scalar-prefetch metadata ---------------------------------
    t_ids = jnp.arange(t_max, dtype=jnp.int32)
    tile_block = jnp.clip(
        jnp.searchsorted(tile_start, t_ids, side="right").astype(jnp.int32) - 1,
        0, n_d_tiles - 1)                                            # dummy tiles -> last block
    tile_first = jnp.zeros((t_max,), jnp.int32).at[tile_start].set(1)

    wp_t = jnp.pad(wp.T.astype(jnp.float32), ((0, 0), (0, out_pad - out_dim)))
    bp_p = jnp.pad(bp.reshape(1, -1).astype(jnp.float32),
                   ((0, 0), (0, out_pad - out_dim)))

    cparams = pltpu.CompilerParams(
        dimension_semantics=("arbitrary",),      # ragged accumulation over edge tiles
        vmem_limit_bytes=_vmem_limit_bytes(),
    )

    out_full = pl.pallas_call(
        functools.partial(v2i_kernel, negative_slope=float(negative_slope),
                          tile_d=int(tile_d)),
        out_shape=jax.ShapeDtypeStruct((n_dst_pad, out_pad), jnp.float32),
        grid_spec=pltpu.PrefetchScalarGridSpec(
            num_scalar_prefetch=2,
            grid=(t_max,),
            in_specs=[
                pl.BlockSpec((tile_e, aux_dim), lambda t, tb, tf: (t, 0)),   # p
                pl.BlockSpec((tile_e, aux_dim), lambda t, tb, tf: (t, 0)),   # lse
                pl.BlockSpec((tile_e, 1), lambda t, tb, tf: (t, 0)),         # local dst id
                pl.BlockSpec((tile_e, out_pad), lambda t, tb, tf: (t, 0)),   # src feats
                pl.BlockSpec((aux_dim, out_pad), lambda t, tb, tf: (0, 0)),  # W_extract_pos.T
                pl.BlockSpec((1, out_pad), lambda t, tb, tf: (0, 0)),        # bias
            ],
            out_specs=pl.BlockSpec((tile_d, out_pad),
                                   lambda t, tb, tf: (tb[t], 0)),
        ),
        compiler_params=cparams,
    )(tile_block, tile_first, p_pad, lse_pad, dloc_pad, src_pad, wp_t, bp_p)

    # rst = th.unsqueeze(g.dstdata['ft'], dim=1)
    return out_full[:n_dst, :out_dim][:, None, :]


def v2i_reference(p, srcdata, src_idx, dst_idx, n_src, n_dst, wp, bp,
                  negative_slope=0.2):
    """Pure-JAX reference of the same forward pass (for validation)."""
    e = jnp.where(p >= 0, p, negative_slope * p)
    max_d = jax.ops.segment_max(e, dst_idx, num_segments=n_dst)
    exp_e = jnp.exp(e - max_d[dst_idx])
    denom = jax.ops.segment_sum(exp_e, dst_idx, num_segments=n_dst)
    a = exp_e / denom[dst_idx]
    a = a @ wp.T + bp
    m = srcdata[src_idx] * a
    ft = jax.ops.segment_sum(m, dst_idx, num_segments=n_dst)
    return ft[:, None, :]


if __name__ == "__main__":
    key = jax.random.PRNGKey(0)
    k1, k2, k3, k4, k5, k6, k7 = jax.random.split(key, 7)

    # Small shapes consistent with the module's forward pass.
    in_dim, aux_dim, out_dim = 16, 4, 8          # self.W (in_dim+aux_dim -> out_dim) is unused
    n_src, n_dst, n_edges = 5, 6, 12

    src_idx = jax.random.randint(k1, (n_edges,), 0, n_src)
    dst_idx = jax.random.randint(k2, (n_edges,), 0, n_dst)

    p = jax.random.normal(k3, (n_edges, aux_dim), dtype=jnp.float32)       # g.edata['p']
    srcdata = jax.random.normal(k4, (n_src, out_dim), dtype=jnp.float32)   # feat[0]
    dstdata = jax.random.normal(k5, (n_dst, out_dim), dtype=jnp.float32)   # feat[1] (unused)

    # Deterministic W_extract_pos parameters (Linear(aux_dim, out_dim)).
    lim = 1.0 / (aux_dim ** 0.5)
    wp = jax.random.uniform(k6, (out_dim, aux_dim), jnp.float32, -lim, lim)
    bp = jax.random.uniform(k7, (out_dim,), jnp.float32, -lim, lim)

    rst = v2i_forward(p, srcdata, src_idx, dst_idx, n_src, n_dst, wp, bp)
    rst = jax.block_until_ready(rst)
    assert rst.shape == (n_dst, 1, out_dim), rst.shape

    ref = v2i_reference(p, srcdata, src_idx, dst_idx, n_src, n_dst, wp, bp)
    np.testing.assert_allclose(np.asarray(rst), np.asarray(ref), rtol=2e-2, atol=2e-2)

    # Second case exercising multiple dst blocks / ragged edge-tile groups.
    kk = jax.random.split(jax.random.PRNGKey(1), 5)
    n_src2, n_dst2, n_edges2, out_dim2 = 24, 50, 300, 32
    src2 = jax.random.randint(kk[0], (n_edges2,), 0, n_src2)
    dst2 = jax.random.randint(kk[1], (n_edges2,), 0, n_dst2)
    p2 = jax.random.normal(kk[2], (n_edges2, aux_dim), dtype=jnp.float32)
    sd2 = jax.random.normal(kk[3], (n_src2, out_dim2), dtype=jnp.float32)
    wp2 = jax.random.uniform(kk[4], (out_dim2, aux_dim), jnp.float32, -lim, lim)
    bp2 = jnp.zeros((out_dim2,), jnp.float32)

    rst2 = jax.block_until_ready(
        v2i_forward(p2, sd2, src2, dst2, n_src2, n_dst2, wp2, bp2,
                    tile_e_max=64, tile_d_max=16))
    ref2 = v2i_reference(p2, sd2, src2, dst2, n_src2, n_dst2, wp2, bp2)
    np.testing.assert_allclose(np.asarray(rst2), np.asarray(ref2), rtol=2e-2, atol=2e-2)

    print("KERNEL_OK")
</pallas_src>

<mosaic_0001>
module attributes {stable_mosaic.version = 11 : i64} {
  func.func @v2i_kernel(%arg0: i32, %arg1: memref<2xi32, #tpu.memory_space<smem>>, %arg2: memref<2xi32, #tpu.memory_space<smem>>, %arg3: memref<16x4xf32, #tpu.memory_space<vmem>>, %arg4: memref<16x4xf32, #tpu.memory_space<vmem>>, %arg5: memref<16x1xi32, #tpu.memory_space<vmem>>, %arg6: memref<16x128xbf16, #tpu.memory_space<vmem>>, %arg7: memref<4x128xf32, #tpu.memory_space<vmem>>, %arg8: memref<1x128xf32, #tpu.memory_space<vmem>>, %arg9: memref<8x128xf32, #tpu.memory_space<vmem>>) attributes {dimension_semantics = [#tpu.dimension_semantics<arbitrary>], iteration_bounds = array<i64: 2>, scalar_prefetch = 2 : i64, scratch_operands = 0 : i64, tpu.core_type = #tpu.core_type<tc>, window_params = [{transform_indices = @transform_0, window_bounds = array<i64: 16, 4>}, {transform_indices = @transform_1, window_bounds = array<i64: 16, 4>}, {transform_indices = @transform_2, window_bounds = array<i64: 16, 1>}, {transform_indices = @transform_3, window_bounds = array<i64: 16, 128>}, {pipeline_mode = #tpu.pipeline_mode<synchronous>, transform_indices = @transform_4, window_bounds = array<i64: 4, 128>}, {pipeline_mode = #tpu.pipeline_mode<synchronous>, transform_indices = @transform_5, window_bounds = array<i64: 1, 128>}, {transform_indices = @transform_6, window_bounds = array<i64: 8, 128>}]} {
    %0 = arith.index_cast %arg0 : i32 to index
    %1 = memref.load %arg2[%0] : memref<2xi32, #tpu.memory_space<smem>>
    %c1_i32 = arith.constant 1 : i32
    %2 = arith.cmpi eq, %1, %c1_i32 : i32
    %3 = arith.extui %2 : i1 to i32
    %c0_i32 = arith.constant 0 : i32
    %4 = arith.cmpi ne, %3, %c0_i32 : i32
    scf.if %4 {
      %cst_20 = arith.constant 0.000000e+00 : f32
      %35 = vector.broadcast %cst_20 : f32 to vector<8x128xf32>
      %c0_21 = arith.constant 0 : index
      %c0_22 = arith.constant 0 : index
      %36 = vector.load %arg9[%c0_21, %c0_22] : memref<8x128xf32, #tpu.memory_space<vmem>>, vector<8x128xf32>
      tpu.vector_store %arg9[%c0_21, %c0_22], %35 {strides = array<i32>} : memref<8x128xf32, #tpu.memory_space<vmem>>, vector<8x128xf32>,
    } else {
    }
    %c0 = arith.constant 0 : index
    %c0_0 = arith.constant 0 : index
    %5 = vector.load %arg3[%c0, %c0_0] : memref<16x4xf32, #tpu.memory_space<vmem>>, vector<16x4xf32>
    %cst = arith.constant 0.000000e+00 : f32
    %6 = vector.broadcast %cst : f32 to vector<16x4xf32>
    %7 = arith.cmpf oge, %5, %6 : vector<16x4xf32>
    %cst_1 = arith.constant 2.000000e-01 : f32
    %8 = vector.broadcast %cst_1 : f32 to vector<16x4xf32>
    %9 = arith.mulf %8, %5 : vector<16x4xf32>
    %10 = arith.select %7, %5, %9 : vector<16x4xi1>, vector<16x4xf32>
    %c0_2 = arith.constant 0 : index
    %c0_3 = arith.constant 0 : index
    %11 = vector.load %arg4[%c0_2, %c0_3] : memref<16x4xf32, #tpu.memory_space<vmem>>, vector<16x4xf32>
    %12 = arith.subf %10, %11 : vector<16x4xf32>
    %13 = math.exp %12 : vector<16x4xf32>
    %c0_4 = arith.constant 0 : index
    %c0_5 = arith.constant 0 : index
    %14 = vector.load %arg7[%c0_4, %c0_5] : memref<4x128xf32, #tpu.memory_space<vmem>>, vector<4x128xf32>
    %cst_6 = arith.constant dense<0.000000e+00> : vector<16x128xf32>
    %15 = tpu.matmul %13, %14, %cst_6 {dimension_numbers = #tpu.dot_dimension_numbers<[1], [0], [0], [1], [0, 0, 1, 1], [], []>} : vector<16x4xf32>, vector<4x128xf32>, vector<16x128xf32> -> vector<16x128xf32>
    %c0_7 = arith.constant 0 : index
    %c0_8 = arith.constant 0 : index
    %16 = vector.load %arg8[%c0_7, %c0_8] : memref<1x128xf32, #tpu.memory_space<vmem>>, vector<1x128xf32>
    %17 = vector.broadcast %16 : vector<1x128xf32> to vector<16x128xf32>
    %18 = arith.addf %15, %17 : vector<16x128xf32>
    %c0_9 = arith.constant 0 : index
    %c0_10 = arith.constant 0 : index
    %19 = vector.load %arg6[%c0_9, %c0_10] : memref<16x128xbf16, #tpu.memory_space<vmem>>, vector<16x128xbf16>
    %20 = arith.extf %19 : vector<16x128xbf16> to vector<16x128xf32>
    %21 = arith.mulf %20, %18 : vector<16x128xf32>
    %c0_11 = arith.constant 0 : index
    %c0_12 = arith.constant 0 : index
    %22 = vector.load %arg5[%c0_11, %c0_12] : memref<16x1xi32, #tpu.memory_space<vmem>>, vector<16x1xi32>
    %23 = tpu.iota {dimensions = array<i32: 1>} : vector<16x8xi32>
    %24 = vector.broadcast %22 : vector<16x1xi32> to vector<16x8xi32>
    %25 = arith.cmpi eq, %24, %23 : vector<16x8xi32>
    %cst_13 = arith.constant 1.000000e+00 : f32
    %cst_14 = arith.constant 0.000000e+00 : f32
    %26 = vector.broadcast %cst_13 : f32 to vector<16x8xf32>
    %27 = vector.broadcast %cst_14 : f32 to vector<16x8xf32>
    %28 = arith.select %25, %26, %27 : vector<16x8xi1>, vector<16x8xf32>
    %29 = arith.truncf %28 : vector<16x8xf32> to vector<16x8xbf16>
    %c0_15 = arith.constant 0 : index
    %c0_16 = arith.constant 0 : index
    %30 = vector.load %arg9[%c0_15, %c0_16] : memref<8x128xf32, #tpu.memory_space<vmem>>, vector<8x128xf32>
    %31 = arith.truncf %21 : vector<16x128xf32> to vector<16x128xbf16>
    %cst_17 = arith.constant dense<0.000000e+00> : vector<8x128xf32>
    %32 = tpu.matmul %29, %31, %cst_17 {dimension_numbers = #tpu.dot_dimension_numbers<[0], [0], [1], [1], [0, 1, 1, 1], [], []>} : vector<16x8xbf16>, vector<16x128xbf16>, vector<8x128xf32> -> vector<8x128xf32>
    %33 = arith.addf %30, %32 : vector<8x128xf32>
    %c0_18 = arith.constant 0 : index
    %c0_19 = arith.constant 0 : index
    %34 = vector.load %arg9[%c0_18, %c0_19] : memref<8x128xf32, #tpu.memory_space<vmem>>, vector<8x128xf32>
    tpu.vector_store %arg9[%c0_18, %c0_19], %33 {strides = array<i32>} : memref<8x128xf32, #tpu.memory_space<vmem>>, vector<8x128xf32>,
    return
  }
  func.func @transform_0(%arg0: i32, %arg1: memref<2xi32, #tpu.memory_space<smem>>, %arg2: memref<2xi32, #tpu.memory_space<smem>>) -> (i32, i32) {
    %c0_i32 = arith.constant 0 : i32
    %c0_i32_0 = arith.constant 0 : i32
    return %arg0, %c0_i32 : i32, i32
  }
  func.func @transform_1(%arg0: i32, %arg1: memref<2xi32, #tpu.memory_space<smem>>, %arg2: memref<2xi32, #tpu.memory_space<smem>>) -> (i32, i32) {
    %c0_i32 = arith.constant 0 : i32
    %c0_i32_0 = arith.constant 0 : i32
    return %arg0, %c0_i32 : i32, i32
  }
  func.func @transform_2(%arg0: i32, %arg1: memref<2xi32, #tpu.memory_space<smem>>, %arg2: memref<2xi32, #tpu.memory_space<smem>>) -> (i32, i32) {
    %c0_i32 = arith.constant 0 : i32
    %c0_i32_0 = arith.constant 0 : i32
    return %arg0, %c0_i32 : i32, i32
  }
  func.func @transform_3(%arg0: i32, %arg1: memref<2xi32, #tpu.memory_space<smem>>, %arg2: memref<2xi32, #tpu.memory_space<smem>>) -> (i32, i32) {
    %c0_i32 = arith.constant 0 : i32
    %c0_i32_0 = arith.constant 0 : i32
    return %arg0, %c0_i32 : i32, i32
  }
  func.func @transform_4(%arg0: i32, %arg1: memref<2xi32, #tpu.memory_space<smem>>, %arg2: memref<2xi32, #tpu.memory_space<smem>>) -> (i32, i32) {
    %c0_i32 = arith.constant 0 : i32
    %c0_i32_0 = arith.constant 0 : i32
    %c0_i32_1 = arith.constant 0 : i32
    return %c0_i32, %c0_i32_0 : i32, i32
  }
  func.func @transform_5(%arg0: i32, %arg1: memref<2xi32, #tpu.memory_space<smem>>, %arg2: memref<2xi32, #tpu.memory_space<smem>>) -> (i32, i32) {
    %c0_i32 = arith.constant 0 : i32
    %c0_i32_0 = arith.constant 0 : i32
    %c0_i32_1 = arith.constant 0 : i32
    return %c0_i32, %c0_i32_0 : i32, i32
  }
  func.func @transform_6(%arg0: i32, %arg1: memref<2xi32, #tpu.memory_space<smem>>, %arg2: memref<2xi32, #tpu.memory_space<smem>>) -> (i32, i32) {
    %0 = arith.index_cast %arg0 : i32 to index
    %1 = memref.load %arg1[%0] : memref<2xi32, #tpu.memory_space<smem>>
    %c0_i32 = arith.constant 0 : i32
    %c0_i32_0 = arith.constant 0 : i32
    return %1, %c0_i32 : i32, i32
  }
}

</mosaic_0001>

<llo_original>
// kernel: tpu_custom_call.1
$region0: #{tpu_custom_call.1}
  #allocation0 [shape = 'u32[]', space=smem, size = 0x4, offset = 0x4, fixed_abs, tag = 'smem constant byte address 0x4 - core index']
  #allocation1 [shape = 'u32[144,128]{1,0:T(1,128)}', space=vmem, size = 0x12000, scoped, tag = 'internal scratch']
  #allocation2 [shape = 's32[1]{0}', space=sflag, size = 0x4, scoped, tag = 'scoped memory for tpu_custom_call.1']
  #allocation3 [shape = 'u8[512]{0}', space=smem, size = 0x200, scoped, tag = 'prefetched SMEM operand 0']
  #allocation4 [shape = 'u8[512]{0}', space=smem, size = 0x200, scoped, tag = 'prefetched SMEM operand 1']
  %s0 = inlined_call_operand.vmem [shape: s32[2], index: 0, kind: input, shape index: {}]
  %s1 = inlined_call_operand.vmem [shape: s32[2], index: 1, kind: input, shape index: {}]
  %s2 = inlined_call_operand.vmem [shape: f32[32,4], index: 2, kind: input, shape index: {}]
  %s3 = inlined_call_operand.vmem [shape: f32[32,4], index: 3, kind: input, shape index: {}]
  %s4 = inlined_call_operand.vmem [shape: s32[32,1], index: 4, kind: input, shape index: {}]
  %s5 = inlined_call_operand.vmem [shape: bf16[32,128], index: 5, kind: input, shape index: {}]
  %s6 = inlined_call_operand.vmem [shape: f32[4,128], index: 6, kind: input, shape index: {}]
  %s7 = inlined_call_operand.vmem [shape: f32[1,128], index: 7, kind: input, shape index: {}]
  %s8 = inlined_call_operand.hbm [shape: f32[8,128], index: 8, kind: output, shape index: {}]
  %s9 = sld [smem:[#allocation0]]
  $region61: #{tpu_custom_call.1} parent=0
    _
  %s11 = ssub.s32 1, %s9
  %s12 = scalar_select 0, %s11, %s9
  %s13 = sshll.u32 %s0, 4
  %s14 = int_to_ptr.vmem [resolvable:$true] %s13
  %16 = dma.vmem_to_smem %s14, 16, [#allocation3], [#allocation2]
  %s17 = sshll.u32 %s1, 4
  %s18 = int_to_ptr.vmem [resolvable:$true] %s17
  %20 = dma.vmem_to_smem %s18, 16, [#allocation4], [#allocation2]
  %21 = dma.done [#allocation2], 32
  %22 = sfence
  $region1: #{tpu_custom_call.1} parent=0
    #allocation5 [shape = 'u8[8192]{0}', space=vmem, size = 0x2000, scoped, tag = 'output window, operand 0']
    #allocation6 [shape = 's32[2]{0}', space=sflag, size = 0x8, scoped, tag = 'scoped memory for tpu_custom_call.1']
    %23 = vsyncpa [#allocation6], 0
    %s24 = scalar_lea.sflag [#allocation6], 1
    %25 = vsyncpa %s24, 0
    loop: start=0, step=1, limit=4
    $region2: #{tpu_custom_call.1} parent=1 // loop_pre_header
      _
    $region3: #{tpu_custom_call.1} parent=1 // loop_header
      %s27 = sphi 0, %s31
      %p28 = scmp.ge.s32.totalorder %s27, 4
      %s37 = sphi 0, %s39
      %s40 = sphi 0, %s37
      %s41 = sphi 0, %s40
      %s57 = sphi 0, %s41
      %s63 = sphi 0, %s65
      %s66 = sphi 0, %s63
      %s67 = sphi 0, %s66
      %s83 = sphi 0, %s67
      %s89 = sphi 0, %s91
      %s92 = sphi 0, %s89
      %s93 = sphi 0, %s92
      %s109 = sphi 0, %s93
      %s115 = sphi 0, %s117
      %s118 = sphi 0, %s115
      %s119 = sphi 0, %s118
      %s135 = sphi 0, %s119
      %s139 = sphi 0, %s139
      %s141 = sphi 0, %s139
      %s142 = sphi 0, %s141
      %s156 = sphi 0, %s142
      %s160 = sphi 0, %s160
      %s162 = sphi 0, %s160
      %s163 = sphi 0, %s162
      %s177 = sphi 0, %s163
      %s185 = sphi 0, %s187
      %s188 = sphi 0, %s185
      %s189 = sphi 0, %s188
      %s205 = sphi 0, %s189
    $region4: #{tpu_custom_call.1} parent=1 // loop_header_branch
      %30 = sbr.rel (%p28) target = $region8
    $region5: #{tpu_custom_call.1} parent=1 // loop_body
      %s32 = ssub.s32 %s27, 1
      %s33 = ssub.s32 %s27, 2
      %s34 = sadd.s32 %s27, 1
      %s35 = ssub.s32 %s27, %s34
      %p36 = scmp.eq.s32.totalorder %s35, 0
      %s38 = sadd.s32 %s37, 1
      %s39 = scalar_select %p36, %s37, %s38
      %p42 = pneg %p36
      %p43 = scmp.eq.s32.totalorder %s27, 1
      %p44 = por %p42, %p43
      %p45 = scmp.ne.s32.totalorder %s37, %s40
      %p46 = scmp.eq.s32.totalorder %s27, 0
      %p47 = por %p45, %p46
      %p48 = scmp.ne.s32.totalorder %s37, %s40
      %p49 = scmp.eq.s32.totalorder %s32, 1
      %p50 = por %p48, %p49
      %p51 = scmp.ne.s32.totalorder %s40, %s41
      %p52 = scmp.eq.s32.totalorder %s32, 0
      %p53 = por %p51, %p52
      %p54 = scmp.ne.s32.totalorder %s40, %s41
      %p55 = scmp.eq.s32.totalorder %s33, 1
      %p56 = por %p54, %p55
      %p58 = scmp.ne.s32.totalorder %s41, %s57
      %p59 = scmp.eq.s32.totalorder %s33, 0
      %p60 = por %p58, %p59
      %s61 = ssub.s32 %s27, %s34
      %p62 = scmp.eq.s32.totalorder %s61, 0
      %s64 = sadd.s32 %s63, 1
      %s65 = scalar_select %p62, %s63, %s64
      %p68 = pneg %p62
      %p69 = scmp.eq.s32.totalorder %s27, 1
      %p70 = por %p68, %p69
      %p71 = scmp.ne.s32.totalorder %s63, %s66
      %p72 = scmp.eq.s32.totalorder %s27, 0
      %p73 = por %p71, %p72
      %p74 = scmp.ne.s32.totalorder %s63, %s66
      %p75 = scmp.eq.s32.totalorder %s32, 1
      %p76 = por %p74, %p75
      %p77 = scmp.ne.s32.totalorder %s66, %s67
      %p78 = scmp.eq.s32.totalorder %s32, 0
      %p79 = por %p77, %p78
      %p80 = scmp.ne.s32.totalorder %s66, %s67
      %p81 = scmp.eq.s32.totalorder %s33, 1
      %p82 = por %p80, %p81
      %p84 = scmp.ne.s32.totalorder %s67, %s83
      %p85 = scmp.eq.s32.totalorder %s33, 0
      %p86 = por %p84, %p85
      %s87 = ssub.s32 %s27, %s34
      %p88 = scmp.eq.s32.totalorder %s87, 0
      %s90 = sadd.s32 %s89, 1
      %s91 = scalar_select %p88, %s89, %s90
      %p94 = pneg %p88
      %p95 = scmp.eq.s32.totalorder %s27, 1
      %p96 = por %p94, %p95
      %p97 = scmp.ne.s32.totalorder %s89, %s92
      %p98 = scmp.eq.s32.totalorder %s27, 0
      %p99 = por %p97, %p98
      %p100 = scmp.ne.s32.totalorder %s89, %s92
      %p101 = scmp.eq.s32.totalorder %s32, 1
      %p102 = por %p100, %p101
      %p103 = scmp.ne.s32.totalorder %s92, %s93
      %p104 = scmp.eq.s32.totalorder %s32, 0
      %p105 = por %p103, %p104
      %p106 = scmp.ne.s32.totalorder %s92, %s93
      %p107 = scmp.eq.s32.totalorder %s33, 1
      %p108 = por %p106, %p107
      %p110 = scmp.ne.s32.totalorder %s93, %s109
      %p111 = scmp.eq.s32.totalorder %s33, 0
      %p112 = por %p110, %p111
      %s113 = ssub.s32 %s27, %s34
      %p114 = scmp.eq.s32.totalorder %s113, 0
      %s116 = sadd.s32 %s115, 1
      %s117 = scalar_select %p114, %s115, %s116
      %p120 = pneg %p114
      %p121 = scmp.eq.s32.totalorder %s27, 1
      %p122 = por %p120, %p121
      %p123 = scmp.ne.s32.totalorder %s115, %s118
      %p124 = scmp.eq.s32.totalorder %s27, 0
      %p125 = por %p123, %p124
      %p126 = scmp.ne.s32.totalorder %s115, %s118
      %p127 = scmp.eq.s32.totalorder %s32, 1
      %p128 = por %p126, %p127
      %p129 = scmp.ne.s32.totalorder %s118, %s119
      %p130 = scmp.eq.s32.totalorder %s32, 0
      %p131 = por %p129, %p130
      %p132 = scmp.ne.s32.totalorder %s118, %s119
      %p133 = scmp.eq.s32.totalorder %s33, 1
      %p134 = por %p132, %p133
      %p136 = scmp.ne.s32.totalorder %s119, %s135
      %p137 = scmp.eq.s32.totalorder %s33, 0
      %p138 = por %p136, %p137
      %s140 = sadd.s32 %s139, 1
      %p143 = scmp.eq.s32.totalorder %s27, 1
      %p144 = scmp.ne.s32.totalorder %s139, %s141
      %p145 = scmp.eq.s32.totalorder %s27, 0
      %p146 = por %p144, %p145
      %p147 = scmp.ne.s32.totalorder %s139, %s141
      %p148 = scmp.eq.s32.totalorder %s32, 1
      %p149 = por %p147, %p148
      %p150 = scmp.ne.s32.totalorder %s141, %s142
      %p151 = scmp.eq.s32.totalorder %s32, 0
      %p152 = por %p150, %p151
      %p153 = scmp.ne.s32.totalorder %s141, %s142
      %p154 = scmp.eq.s32.totalorder %s33, 1
      %p155 = por %p153, %p154
      %p157 = scmp.ne.s32.totalorder %s142, %s156
      %p158 = scmp.eq.s32.totalorder %s33, 0
      %p159 = por %p157, %p158
      %s161 = sadd.s32 %s160, 1
      %p164 = scmp.eq.s32.totalorder %s27, 1
      %p165 = scmp.ne.s32.totalorder %s160, %s162
      %p166 = scmp.eq.s32.totalorder %s27, 0
      %p167 = por %p165, %p166
      %p168 = scmp.ne.s32.totalorder %s160, %s162
      %p169 = scmp.eq.s32.totalorder %s32, 1
      %p170 = por %p168, %p169
      %p171 = scmp.ne.s32.totalorder %s162, %s163
      %p172 = scmp.eq.s32.totalorder %s32, 0
      %p173 = por %p171, %p172
      %p174 = scmp.ne.s32.totalorder %s162, %s163
      %p175 = scmp.eq.s32.totalorder %s33, 1
      %p176 = por %p174, %p175
      %p178 = scmp.ne.s32.totalorder %s163, %s177
      %p179 = scmp.eq.s32.totalorder %s33, 0
      %p180 = por %p178, %p179
      %s181 = sld [smem:[#allocation3 + %s27]]
      %s182 = sld [smem:[#allocation3 + %s34]]
      %s183 = ssub.s32 %s181, %s182
      %p184 = scmp.eq.s32.totalorder %s183, 0
      %s186 = sadd.s32 %s185, 1
      %s187 = scalar_select %p184, %s185, %s186
      %p190 = pneg %p184
      %p191 = scmp.eq.s32.totalorder %s27, 1
      %p192 = por %p190, %p191
      %p193 = scmp.ne.s32.totalorder %s185, %s188
      %p194 = scmp.eq.s32.totalorder %s27, 0
      %p195 = por %p193, %p194
      %p196 = scmp.ne.s32.totalorder %s185, %s188
      %p197 = scmp.eq.s32.totalorder %s32, 1
      %p198 = por %p196, %p197
      %p199 = scmp.ne.s32.totalorder %s188, %s189
      %p200 = scmp.eq.s32.totalorder %s32, 0
      %p201 = por %p199, %p200
      %p202 = scmp.ne.s32.totalorder %s188, %s189
      %p203 = scmp.eq.s32.totalorder %s33, 1
      %p204 = por %p202, %p203
      %p206 = scmp.ne.s32.totalorder %s189, %s205
      %p207 = scmp.eq.s32.totalorder %s33, 0
      %p208 = por %p206, %p207
      %p209 = scmp.le.s32.totalorder 1, %s27
      %p210 = scmp.lt.s32.totalorder %s27, 3
      %p211 = pnand %p209, %p210
      %p212 = pneg %p211
      // Predicated region
      $region9: #{tpu_custom_call.1} parent=5 // pred_check
        _
      $region10: #{tpu_custom_call.1} parent=5 // pred_check_branch
        %214 = sbr.rel (%p211) target = $region12
      $region11: #{tpu_custom_call.1} parent=5 // pred_region
        %s215 = ssub.s32 %s27, 1
        // Predicated region
        $region13: #{tpu_custom_call.1} parent=11 // pred_check
          %p216 = pneg %p152
        $region14: #{tpu_custom_call.1} parent=11 // pred_check_branch
          %218 = sbr.rel (%p216) target = $region16
        $region15: #{tpu_custom_call.1} parent=11 // pred_region
          _
        $region16: #{tpu_custom_call.1} parent=11 // pred_fallthru
          _
        // Predicated region
        $region17: #{tpu_custom_call.1} parent=11 // pred_check
          %p219 = pneg %p173
        $region18: #{tpu_custom_call.1} parent=11 // pred_check_branch
          %221 = sbr.rel (%p219) target = $region20
        $region19: #{tpu_custom_call.1} parent=11 // pred_region
          _
        $region20: #{tpu_custom_call.1} parent=11 // pred_fallthru
          _
      $region12: #{tpu_custom_call.1} parent=5 // pred_fallthru
        _
      %p222 = scmp.lt.s32.totalorder %s27, 2
      // Predicated region
      $region21: #{tpu_custom_call.1} parent=5 // pred_check
        %p223 = pneg %p222
      $region22: #{tpu_custom_call.1} parent=5 // pred_check_branch
        %225 = sbr.rel (%p223) target = $region24
      $region23: #{tpu_custom_call.1} parent=5 // pred_region
        // Predicated region
        $region25: #{tpu_custom_call.1} parent=23 // pred_check
          %p226 = pneg %p47
        $region26: #{tpu_custom_call.1} parent=23 // pred_check_branch
          %228 = sbr.rel (%p226) target = $region28
        $region27: #{tpu_custom_call.1} parent=23 // pred_region
          %s229 = smul.u32 2, %s27
          %p230 = scmp.lt.s32.totalorder %s229, 3
          %s231 = scalar_select %p230, %s229, 3
          %s232 = smul.addr %s231, 8
          %s233 = scalar_lea.vmem %s2, %s232
          %s234 = smul.u32 2, %s27
        $region28: #{tpu_custom_call.1} parent=23 // pred_fallthru
          _
        // Predicated region
        $region29: #{tpu_custom_call.1} parent=23 // pred_check
          %p235 = pneg %p73
        $region30: #{tpu_custom_call.1} parent=23 // pred_check_branch
          %237 = sbr.rel (%p235) target = $region32
        $region31: #{tpu_custom_call.1} parent=23 // pred_region
          %s238 = smul.u32 2, %s27
          %p239 = scmp.lt.s32.totalorder %s238, 3
          %s240 = scalar_select %p239, %s238, 3
          %s241 = smul.addr %s240, 8
          %s242 = scalar_lea.vmem %s3, %s241
          %s243 = smul.u32 2, %s27
        $region32: #{tpu_custom_call.1} parent=23 // pred_fallthru
          _
        // Predicated region
        $region33: #{tpu_custom_call.1} parent=23 // pred_check
          %p244 = pneg %p99
        $region34: #{tpu_custom_call.1} parent=23 // pred_check_branch
          %246 = sbr.rel (%p244) target = $region36
        $region35: #{tpu_custom_call.1} parent=23 // pred_region
          %s247 = smul.u32 2, %s27
          %p248 = scmp.lt.s32.totalorder %s247, 3
          %s249 = scalar_select %p248, %s247, 3
          %s250 = smul.addr %s249, 8
          %s251 = scalar_lea.vmem %s4, %s250
          %s252 = smul.u32 2, %s27
        $region36: #{tpu_custom_call.1} parent=23 // pred_fallthru
          _
        // Predicated region
        $region37: #{tpu_custom_call.1} parent=23 // pred_check
          %p253 = pneg %p125
        $region38: #{tpu_custom_call.1} parent=23 // pred_check_branch
          %255 = sbr.rel (%p253) target = $region40
        $region39: #{tpu_custom_call.1} parent=23 // pred_region
          %s256 = smul.u32 2, %s27
          %p257 = scmp.lt.s32.totalorder %s256, 3
          %s258 = scalar_select %p257, %s256, 3
          %s259 = smul.addr %s258, 4
          %s260 = scalar_lea.vmem %s5, %s259
          %s261 = smul.u32 2, %s27
        $region40: #{tpu_custom_call.1} parent=23 // pred_fallthru
          _
      $region24: #{tpu_custom_call.1} parent=5 // pred_fallthru
        _
      %p262 = scmp.le.s32.totalorder 1, %s27
      %p263 = scmp.lt.s32.totalorder %s27, 3
      %p264 = pnand %p262, %p263
      %p265 = pneg %p264
      // Predicated region
      $region41: #{tpu_custom_call.1} parent=5 // pred_check
        _
      $region42: #{tpu_custom_call.1} parent=5 // pred_check_branch
        %267 = sbr.rel (%p264) target = $region44
      $region43: #{tpu_custom_call.1} parent=5 // pred_region
        %s268 = ssub.s32 %s27, 1
        %s269 = smul.u32 2, %s32
        %p270 = scmp.lt.s32.totalorder %s269, 3
        %s271 = scalar_select %p270, %s269, 3
        %s272 = smul.addr %s271, 8
        %s273 = scalar_lea.vmem %s2, %s272
        %p274 = pneg %p53
        %p275 = pneg %p50
        %s276 = smul.u32 2, %s32
        %p277 = scmp.lt.s32.totalorder %s276, 3
        %s278 = scalar_select %p277, %s276, 3
        %s279 = smul.addr %s278, 8
        %s280 = scalar_lea.vmem %s3, %s279
        %p281 = pneg %p79
        %p282 = pneg %p76
        %s283 = smul.u32 2, %s32
        %p284 = scmp.lt.s32.totalorder %s283, 3
        %s285 = scalar_select %p284, %s283, 3
        %s286 = smul.addr %s285, 8
        %s287 = scalar_lea.vmem %s4, %s286
        %p288 = pneg %p105
        %p289 = pneg %p102
        %s290 = smul.u32 2, %s32
        %p291 = scmp.lt.s32.totalorder %s290, 3
        %s292 = scalar_select %p291, %s290, 3
        %s293 = smul.addr %s292, 4
        %s294 = scalar_lea.vmem %s5, %s293
        %p295 = pneg %p131
        %p296 = pneg %p128
        %p297 = pneg %p152
        %p298 = pneg %p149
        %p299 = pneg %p173
        %p300 = pneg %p170
        %p301 = pneg %p201
        %p302 = pneg %p198
        %s303 = sand.u32 %s188, 1
        %s304 = scalar_lea.sflag [#allocation6], %s303
        %s305 = sand.u32 %s188, 1
        %s306 = smul.addr %s305, 8
        %s307 = scalar_lea.vmem [#allocation5], %s306
        %s308 = smul.u32 2, %s32
        %p309 = scmp.lt.s32.totalorder %s308, 3
        %s310 = scalar_select %p309, %s308, 3
        %s311 = smul.addr %s310, 8
        %s312 = scalar_lea.vmem %s2, %s311
        %s313 = smul.u32 2, %s32
        %s314 = smul.u32 2, %s32
        %p315 = scmp.lt.s32.totalorder %s314, 3
        %s316 = scalar_select %p315, %s314, 3
        %s317 = smul.addr %s316, 8
        %s318 = scalar_lea.vmem %s3, %s317
        %s319 = smul.u32 2, %s32
        %s320 = smul.u32 2, %s32
        %p321 = scmp.lt.s32.totalorder %s320, 3
        %s322 = scalar_select %p321, %s320, 3
        %s323 = smul.addr %s322, 8
        %s324 = scalar_lea.vmem %s4, %s323
        %s325 = smul.u32 2, %s32
        %s326 = smul.u32 2, %s32
        %p327 = scmp.lt.s32.totalorder %s326, 3
        %s328 = scalar_select %p327, %s326, 3
        %s329 = smul.addr %s328, 4
        %s330 = scalar_lea.vmem %s5, %s329
        %s331 = smul.u32 2, %s32
        %s332 = sld [smem:[#allocation3 + %s32]]
        %s334 = sld [smem:[#allocation4 + %s32]]
        %p335 = scmp.eq.s32.totalorder %s334, 1
        // Predicated region
        $region45: #{tpu_custom_call.1} parent=43 // pred_check
          %p336 = pneg %p335
        $region46: #{tpu_custom_call.1} parent=43 // pred_check_branch
          %338 = sbr.rel (%p336) target = $region48
        $region47: #{tpu_custom_call.1} parent=43 // pred_region
          %339 = vst [vmem:[%s307] sm:$0xff] 0.0
        $region48: #{tpu_custom_call.1} parent=43 // pred_fallthru
          _
        %v340 = vld [vmem:[%s312] sm:$0xff]
        %v341 = vld [vmem:[%s312 + $0x8] sm:$0xff]
        %vm342 = vcmp.ge.f32.partialorder %v340, 0.0
        %vm343 = vcmp.ge.f32.partialorder %v341, 0.0
        %v344 = vmul.f32 %v340, 0.2
        %v345 = vmul.f32 %v341, 0.2
        %v346 = vsel %vm342, %v340, %v344
        %v347 = vsel %vm343, %v341, %v345
        %v348 = vld [vmem:[%s318] sm:$0xff]
        %v349 = vld [vmem:[%s318 + $0x8] sm:$0xff]
        %v350 = vsub.f32 %v346, %v348
        %v351 = vsub.f32 %v347, %v349
        %v352 = vmul.f32 %v350, 1.442695
        %v353 = vpow.pop %v352
        %v354 = vmul.f32 %v351, 1.442695
        %v355 = vpow.pop %v354
        %v356 = vld [vmem:[%s6] sm:$0xf]
        %v357 = vld [vmem:[%s7] sm:$0x1]
        %v359 = vlaneseq
        %v360 = vshrl.u32 %v359, 7
        %v361 = vsub.s32 0, %v360
        %v362 = vrot.slane %v357, %v361
        %vm364 = vcmask 31744
        %v366 = vsel %vm364, %v353, 0
        %v369 = vsel %vm364, %v355, 0
        %vm371 = vcmask 1043456
        %v373 = vsel %vm371, %v356, 0
        %375 = vmatprep.subr.mxu0 0.0
        %376 = vmatpush1.msra.mxu0 %v373
        %377 = vmatprep.subr.mxu0 0.0
        %378 = vmatpush1.msra.mxu0 0.0
        %379 = vmatprep.subr.mxu0 0.0
        %380 = vmatpush1.msra.mxu0 0.0
        %381 = vmatprep.subr.mxu0 0.0
        %382 = vmatpush1.msra.mxu0 0.0
        %383 = vmatprep.subr.mxu0 0.0
        %384 = vmatpush1.msra.mxu0 0.0
        %385 = vmatprep.subr.mxu0 0.0
        %386 = vmatpush1.msra.mxu0 0.0
        %387 = vmatprep.subr.mxu0 0.0
        %388 = vmatpush1.msra.mxu0 0.0
        %389 = vmatprep.subr.mxu0 0.0
        %390 = vmatpush1.msra.mxu0 0.0
        %391 = vmatprep.subr.mxu0 0.0
        %392 = vmatpush1.msra.mxu0 0.0
        %393 = vmatprep.subr.mxu0 0.0
        %394 = vmatpush1.msra.mxu0 0.0
        %395 = vmatprep.subr.mxu0 0.0
        %396 = vmatpush1.msra.mxu0 0.0
        %397 = vmatprep.subr.mxu0 0.0
        %398 = vmatpush1.msra.mxu0 0.0
        %399 = vmatprep.subr.mxu0 0.0
        %400 = vmatpush1.msra.mxu0 0.0
        %401 = vmatprep.subr.mxu0 0.0
        %402 = vmatpush1.msra.mxu0 0.0
        %403 = vmatprep.subr.mxu0 0.0
        %404 = vmatpush1.msra.mxu0 0.0
        %405 = vmatprep.subr.mxu0 0.0
        %406 = vmatpush1.msra.mxu0 0.0
        %407 = vmatprep.subr.mxu0 0.0
        %408 = vmatpush1.msra.mxu0 0.0
        %409 = vmatprep.subr.mxu0 0.0
        %410 = vmatpush1.msra.mxu0 0.0
        %411 = vmatprep.subr.mxu0 0.0
        %412 = vmatpush1.msra.mxu0 0.0
        %413 = vmatprep.subr.mxu0 0.0
        %414 = vmatpush1.msra.mxu0 0.0
        %415 = vmatprep.subr.mxu0 0.0
        %416 = vmatpush1.msra.mxu0 0.0
        %417 = vmatprep.subr.mxu0 0.0
        %418 = vmatpush1.msra.mxu0 0.0
        %419 = vmatprep.subr.mxu0 0.0
        %420 = vmatpush1.msra.mxu0 0.0
        %421 = vmatprep.subr.mxu0 0.0
        %422 = vmatpush1.msra.mxu0 0.0
        %423 = vmatprep.subr.mxu0 0.0
        %424 = vmatpush1.msra.mxu0 0.0
        %425 = vmatprep.subr.mxu0 0.0
        %426 = vmatpush1.msra.mxu0 0.0
        %427 = vmatprep.subr.mxu0 0.0
        %428 = vmatpush1.msra.mxu0 0.0
        %429 = vmatprep.subr.mxu0 0.0
        %430 = vmatpush1.msra.mxu0 0.0
        %431 = vmatprep.subr.mxu0 0.0
        %432 = vmatpush1.msra.mxu0 0.0
        %433 = vmatprep.subr.mxu0 0.0
        %434 = vmatpush1.msra.mxu0 0.0
        %435 = vmatprep.subr.mxu0 0.0
        %436 = vmatpush1.msra.mxu0 0.0
        %437 = vmatprep.subr.mxu0 0.0
        %438 = vmatpush1.msra.mxu0 0.0
        %439 = vmatprep.mubr.f32.mxu0 0.0
        %440 = vmatmul.mubr.f32.gmra.mrb[0].mxu0 %v366
        %v441 = vpop.f32.mrb[0].mxu0
        %v442 = vadd.f32 %v362, %v441
        %v443 = vpop.f32.mrb[0].mxu0
        %444 = vmatprep.mubr.f32.mxu0 0.0
        %445 = vmatmul.mubr.f32.gmra.mrb[0].mxu0 %v369
        %v446 = vpop.f32.mrb[0].mxu0
        %v447 = vadd.f32 %v362, %v446
        %v448 = vpop.f32.mrb[0].mxu0
        %449 = vdwg.mxu0
        %v450 = vld [vmem:[%s330] sm:$0xf]
        %v451 = vld [vmem:[%s330 + $0x4] sm:$0xf]
        %v452 = vunpack.c.l.bf16 %v450
        %v453 = vunpack.c.l.bf16 %v451
        %v454 = vmul.f32 %v452, %v442
        %v455 = vmul.f32 %v453, %v447
        %v456 = vld [vmem:[%s324] sm:$0xff]
        %v457 = vld [vmem:[%s324 + $0x8] sm:$0xff]
        %v458 = vlaneseq
        %v459 = vand.u32 %v458, 127
        %460 = vset.pattern.permute.xlu0 0
        %461 = vperm.xlu0 %460, %v456
        %v462 = vpop.permute.xlu0 %461
        %463 = vset.pattern.permute.xlu0 0
        %464 = vperm.xlu0 %463, %v457
        %v465 = vpop.permute.xlu0 %464
        %vm466 = vcmp.eq.s32.totalorder %v462, %v459
        %vm467 = vcmp.eq.s32.totalorder %v465, %v459
        %v468 = vsel %vm466, 1.0, 0.0
        %v469 = vsel %vm467, 1.0, 0.0
        %v470 = vpack.c.bf16 %v469, %v468
        %v471 = vld [vmem:[%s307] sm:$0xff]
        %v472 = vpack.c.bf16 %v455, %v454
        %473 = vxpose.xlu0.c.b16.start [1/8] %v470, 128
        %474 = vxpose.xlu0.c.b16.cont [2/8] 0, 128
        %475 = vxpose.xlu0.c.b16.cont [3/8] 0, 128
        %476 = vxpose.xlu0.c.b16.cont [4/8] 0, 128
        %477 = vxpose.xlu0.c.b16.cont [5/8] 0, 128
        %478 = vxpose.xlu0.c.b16.cont [6/8] 0, 128
        %479 = vxpose.xlu0.c.b16.cont [7/8] 0, 128
        %480 = vxpose.xlu0.c.b16.end [8/8] 0, 128
        %v481 = vpop.trf.xlu0
        %v482 = vpop.trf.xlu0
        %v483 = vpop.trf.xlu0
        %v484 = vpop.trf.xlu0
        %v485 = vpop.trf.xlu0
        %v486 = vpop.trf.xlu0
        %v487 = vpop.trf.xlu0
        %v488 = vpop.trf.xlu0
        %vm489 = vcmask 130048
        %v491 = vsel %vm489, %v481, 0
        %493 = vmatprep.subr.bf16.mxu0 0
        %494 = vmatpush1.bf16.msra.mxu0 %v472
        %495 = vmatprep.subr.bf16.mxu0 0
        %496 = vmatpush1.bf16.msra.mxu0 0
        %497 = vmatprep.subr.bf16.mxu0 0
        %498 = vmatpush1.bf16.msra.mxu0 0
        %499 = vmatprep.subr.bf16.mxu0 0
        %500 = vmatpush1.bf16.msra.mxu0 0
        %501 = vmatprep.subr.bf16.mxu0 0
        %502 = vmatpush1.bf16.msra.mxu0 0
        %503 = vmatprep.subr.bf16.mxu0 0
        %504 = vmatpush1.bf16.msra.mxu0 0
        %505 = vmatprep.subr.bf16.mxu0 0
        %506 = vmatpush1.bf16.msra.mxu0 0
        %507 = vmatprep.subr.bf16.mxu0 0
        %508 = vmatpush1.bf16.msra.mxu0 0
        %509 = vmatprep.subr.bf16.mxu0 0
        %510 = vmatpush1.bf16.msra.mxu0 0
        %511 = vmatprep.subr.bf16.mxu0 0
        %512 = vmatpush1.bf16.msra.mxu0 0
        %513 = vmatprep.subr.bf16.mxu0 0
        %514 = vmatpush1.bf16.msra.mxu0 0
        %515 = vmatprep.subr.bf16.mxu0 0
        %516 = vmatpush1.bf16.msra.mxu0 0
        %517 = vmatprep.subr.bf16.mxu0 0
        %518 = vmatpush1.bf16.msra.mxu0 0
        %519 = vmatprep.subr.bf16.mxu0 0
        %520 = vmatpush1.bf16.msra.mxu0 0
        %521 = vmatprep.subr.bf16.mxu0 0
        %522 = vmatpush1.bf16.msra.mxu0 0
        %523 = vmatprep.subr.bf16.mxu0 0
        %524 = vmatpush1.bf16.msra.mxu0 0
        %525 = vmatprep.mubr.bf16.mxu0 0
        %526 = vmatmul.mubr.bf16.gmra.mrb[0].mxu0 %v491
        %v527 = vpop.f32.mrb[0].mxu0
        %v528 = vadd.f32 0.0, %v527
        %v529 = vpop.f32.mrb[0].mxu0
        %v530 = vpop.f32.mrb[0].mxu0
        %v531 = vpop.f32.mrb[0].mxu0
        %532 = vdwg.mxu0
        %v533 = vadd.f32 %v471, %v528
        %534 = vst [vmem:[%s307] sm:$0xff] %v533
        %s535 = sand.u32 %s188, 1
        %s536 = scalar_lea.sflag [#allocation6], %s535
        %s537 = sand.u32 %s188, 1
        %s538 = smul.addr %s537, 8
        %s539 = scalar_lea.vmem [#allocation5], %s538
        // Predicated region
        $region49: #{tpu_custom_call.1} parent=43 // pred_check
          %p540 = pneg %p198
        $region50: #{tpu_custom_call.1} parent=43 // pred_check_branch
          %542 = sbr.rel (%p540) target = $region52
        $region51: #{tpu_custom_call.1} parent=43 // pred_region
          %s543 = sld [smem:[#allocation3 + %s32]]
          %s545 = ssub.s32 128, 128
          %546 = vsyncadd %s536, %s545
          %s547 = smul.addr %s543, 128
          %s548 = scalar_lea.hbm %s8, %s547
          %s550 = sshll.u32 %s539, 4
          %s551 = int_to_ptr.vmem [resolvable:$true] %s550
          %553 = dma.vmem_to_hbm [thread:$0]  %s551, 128, %s548, %s536
        $region52: #{tpu_custom_call.1} parent=43 // pred_fallthru
          _
      $region44: #{tpu_custom_call.1} parent=5 // pred_fallthru
        _
      %p554 = scmp.le.s32.totalorder 2, %s27
      // Predicated region
      $region53: #{tpu_custom_call.1} parent=5 // pred_check
        %p555 = pneg %p554
      $region54: #{tpu_custom_call.1} parent=5 // pred_check_branch
        %557 = sbr.rel (%p555) target = $region56
      $region55: #{tpu_custom_call.1} parent=5 // pred_region
        %s558 = ssub.s32 %s27, 2
        // Predicated region
        $region57: #{tpu_custom_call.1} parent=55 // pred_check
          %p559 = pneg %p204
        $region58: #{tpu_custom_call.1} parent=55 // pred_check_branch
          %561 = sbr.rel (%p559) target = $region60
        $region59: #{tpu_custom_call.1} parent=55 // pred_region
          %s562 = sand.u32 %s189, 1
          %s563 = scalar_lea.sflag [#allocation6], %s562
          %s564 = sand.u32 %s189, 1
          %s565 = smul.addr %s564, 8
          %s566 = scalar_lea.vmem [#allocation5], %s565
          %567 = dma.done %s563, 128
        $region60: #{tpu_custom_call.1} parent=55 // pred_fallthru
          _
      $region56: #{tpu_custom_call.1} parent=5 // pred_fallthru
        _
    $region6: #{tpu_custom_call.1} parent=1 // loop_footer
      %s31 = sadd.s32 1, %s27
    $region7: #{tpu_custom_call.1} parent=1 // loop_footer_branch
      %26 = sbr.rel target = $region3
    $region8: #{tpu_custom_call.1} parent=1 // loop_exit
      _
    %568 = vsyncpa [#allocation6], 1
    %s569 = scalar_lea.sflag [#allocation6], 1
    %570 = vsyncpa %s569, 1

</llo_original>
